<compile_context>
chip_gen: v7x
topology: tpu7x:2x2x1
jax: 0.10.0
libtpu: 0.0.40
codegen_flags: <defaults>
</compile_context>

<pallas_src>
import functools

import jax
import jax.numpy as jnp
from jax.experimental import pallas as pl
from jax.experimental.pallas import tpu as pltpu

_BF16_SUBLANE = 16   # bf16 min sublane tile


def _round_up(n, m):
    return ((n + m - 1) // m) * m


def _disc_kernel(x_ref, w1_ref, b1_ref, w2_ref, b2_ref, w3_ref, b3_ref, o_ref):
    """One batch tile of the fused discriminator MLP.

    x_ref : (TB, K)    f32   flattened image tile (cast to bf16 in-register)
    w1_ref: (K, 512)   bf16  b1_ref: (1, 512) bf16
    w2_ref: (512, 256) bf16  b2_ref: (1, 256) bf16
    w3_ref: (256, 1)   bf16  b3_ref: (1, 1)   f32
    o_ref : (TB, 1)    f32   sigmoid(logits)
    """
    bf16 = jnp.bfloat16

    # Layer 1: (TB, K) @ (K, 512) on the MXU, f32 accumulation.  Bias add and
    # LeakyReLU stay in bf16 to halve VALU / spill traffic of the (TB,512)
    # intermediate (it is consumed as bf16 by the next matmul anyway).
    h1 = jnp.dot(x_ref[...].astype(bf16), w1_ref[...],
                 preferred_element_type=jnp.float32)
    h1 = h1.astype(bf16) + b1_ref[...]
    h1 = jnp.maximum(h1, 0.2 * h1)                      # LeakyReLU(0.2), bf16

    # Layer 2: (TB, 512) @ (512, 256).
    h2 = jnp.dot(h1, w2_ref[...], preferred_element_type=jnp.float32)
    h2 = h2.astype(bf16) + b2_ref[...]
    h2 = jnp.maximum(h2, 0.2 * h2)                      # LeakyReLU(0.2), bf16

    # Layer 3: (TB, 256) @ (256, 1) -> (TB, 1).  Plain column output (masked
    # store is only ~TB/8 vst ops, negligible) instead of a transposed
    # contraction that could hide an XLU transpose of h2.
    logits = jnp.dot(h2, w3_ref[...], preferred_element_type=jnp.float32)
    logits = logits + b3_ref[...]                       # (1,1) f32 broadcast

    o_ref[...] = jax.nn.sigmoid(logits)


def prepare_params(params):
    """One-time param prep: cast matmul weights / biases to bf16 and reshape
    into kernel-ready 2-D layouts.  Final bias stays f32."""
    w1, b1, w2, b2, w3, b3 = params
    return (
        w1.astype(jnp.bfloat16),                          # (K, 512)
        jnp.reshape(b1, (1, -1)).astype(jnp.bfloat16),    # (1, 512)
        w2.astype(jnp.bfloat16),                          # (512, 256)
        jnp.reshape(b2, (1, -1)).astype(jnp.bfloat16),    # (1, 256)
        jnp.reshape(w3, (-1, 1)).astype(jnp.bfloat16),    # (256, 1)
        jnp.reshape(b3, (1, 1)).astype(jnp.float32),      # (1, 1)
    )


@functools.partial(jax.jit, static_argnames=("block_b",))
def discriminator_forward(img, prepped, *, block_b=1024):
    """img: (B, c, r) float32, prepped = prepare_params(raw). Returns (B, 1)."""
    w1, b1, w2, b2, w3, b3 = prepped
    B = img.shape[0]
    K = w1.shape[0]

    # nn.Flatten: free bitcast under XLA; no pad / cast of x is materialized
    # in HBM — the bf16 cast happens inside the kernel on the VMEM tile.
    x = img.reshape(B, -1).astype(jnp.float32)
    assert x.shape[1] == K

    # Batch tile: multiple of 16 (bf16 min sublane tile) and chosen so the
    # grid has >= 2 steps whenever B allows it (v7x megacore + DMA overlap).
    block_b = max(_BF16_SUBLANE, _round_up(block_b, _BF16_SUBLANE))
    tb = min(block_b, _round_up(pl.cdiv(B, 2), _BF16_SUBLANE))
    b_pad = _round_up(B, tb)
    num_tiles = b_pad // tb
    if b_pad != B:
        x = jnp.pad(x, ((0, b_pad - B), (0, 0)))

    weight_bytes = (K * 512 + 512 * 256 + 256) * 2 + (512 + 256) * 2 + 4
    cost = pl.CostEstimate(
        flops=2 * b_pad * (K * 512 + 512 * 256 + 256),
        transcendentals=b_pad,                      # sigmoid
        bytes_accessed=b_pad * K * 4 + weight_bytes + b_pad * 4,
    )

    out = pl.pallas_call(
        _disc_kernel,
        out_shape=jax.ShapeDtypeStruct((b_pad, 1), jnp.float32),
        grid=(num_tiles,),
        in_specs=[
            pl.BlockSpec((tb, K), lambda i: (i, 0)),     # x tile, pipelined
            pl.BlockSpec(w1.shape, lambda i: (0, 0)),    # weights VMEM-resident
            pl.BlockSpec(b1.shape, lambda i: (0, 0)),    # (constant index_map:
            pl.BlockSpec(w2.shape, lambda i: (0, 0)),    #  fetched once, not
            pl.BlockSpec(b2.shape, lambda i: (0, 0)),    #  re-DMA'd per step)
            pl.BlockSpec(w3.shape, lambda i: (0, 0)),
            pl.BlockSpec(b3.shape, lambda i: (0, 0)),
        ],
        out_specs=pl.BlockSpec((tb, 1), lambda i: (i, 0)),
        compiler_params=pltpu.CompilerParams(
            dimension_semantics=("parallel",),           # megacore on v7x
            vmem_limit_bytes=16 * 1024 * 1024,           # actual footprint < 4 MiB
        ),
        cost_estimate=cost,
    )(x, w1, b1, w2, b2, w3, b3)

    return out[:B]


def init_params(key, in_features):
    """PyTorch-default-style Linear init: U(+-1/sqrt(fan_in)).
    Weights stored (in, out); biases (out,)."""
    dims = [(in_features, 512), (512, 256), (256, 1)]
    params = []
    for fan_in, fan_out in dims:
        key, kw, kb = jax.random.split(key, 3)
        bound = 1.0 / jnp.sqrt(float(fan_in))
        w = jax.random.uniform(kw, (fan_in, fan_out), jnp.float32, -bound, bound)
        b = jax.random.uniform(kb, (fan_out,), jnp.float32, -bound, bound)
        params += [w, b]
    return tuple(params)


def reference_forward(img, params):
    """Pure-f32 JAX reference of the PyTorch module."""
    w1, b1, w2, b2, w3, b3 = params
    x = img.reshape(img.shape[0], -1)
    h = x @ w1 + b1
    h = jnp.where(h > 0, h, 0.2 * h)
    h = h @ w2 + b2
    h = jnp.where(h > 0, h, 0.2 * h)
    h = h @ w3 + b3
    return jax.nn.sigmoid(h)


def reference_forward_kernelmath(img, params):
    """Same math as the kernel: bf16 matmul operands / f32 accumulation and
    bf16 bias-add + LeakyReLU on the hidden activations."""
    w1, b1, w2, b2, w3, b3 = params
    bf16 = jnp.bfloat16
    x = img.reshape(img.shape[0], -1)

    def dot_bf16(a, b):
        return jnp.dot(a.astype(bf16), b.astype(bf16),
                       preferred_element_type=jnp.float32)

    h = dot_bf16(x, w1).astype(bf16) + b1.astype(bf16)
    h = jnp.maximum(h, 0.2 * h)
    h = dot_bf16(h, w2).astype(bf16) + b2.astype(bf16)
    h = jnp.maximum(h, 0.2 * h)
    logits = dot_bf16(h, w3) + b3
    return jax.nn.sigmoid(logits)


if __name__ == "__main__":
    c, r = 6, 16                        # module defaults: Linear(c*r=96, 512)
    B = 8

    key = jax.random.PRNGKey(0)
    key, kimg = jax.random.split(key)
    img = jax.random.normal(kimg, (B, c, r), dtype=jnp.float32)

    raw = init_params(key, c * r)
    prepped = prepare_params(raw)

    out = jax.block_until_ready(discriminator_forward(img, prepped))
    assert out.shape == (B, 1)
    assert jnp.allclose(out, reference_forward_kernelmath(img, raw), atol=2e-3), \
        "mismatch vs bf16-matched reference"
    assert jnp.allclose(out, reference_forward(img, raw), atol=3e-2), \
        "mismatch vs f32 reference"

    # Multi-tile / padded-batch path (B not a multiple of the batch tile).
    B2 = 40
    key, kimg2 = jax.random.split(key)
    img2 = jax.random.normal(kimg2, (B2, c, r), dtype=jnp.float32)
    out2 = jax.block_until_ready(discriminator_forward(img2, prepped, block_b=16))
    assert out2.shape == (B2, 1)
    assert jnp.allclose(out2, reference_forward_kernelmath(img2, raw), atol=2e-3), \
        "multi-tile mismatch vs bf16-matched reference"

    print("KERNEL_OK")
</pallas_src>

<mosaic_0001>
module attributes {stable_mosaic.version = 11 : i64} {
  func.func @_disc_kernel(%arg0: i32, %arg1: memref<16x96xf32, #tpu.memory_space<vmem>>, %arg2: memref<96x512xbf16, #tpu.memory_space<vmem>>, %arg3: memref<1x512xbf16, #tpu.memory_space<vmem>>, %arg4: memref<512x256xbf16, #tpu.memory_space<vmem>>, %arg5: memref<1x256xbf16, #tpu.memory_space<vmem>>, %arg6: memref<256x1xbf16, #tpu.memory_space<vmem>>, %arg7: memref<1x1xf32, #tpu.memory_space<vmem>>, %arg8: memref<16x1xf32, #tpu.memory_space<vmem>>) attributes {dimension_semantics = [#tpu.dimension_semantics<parallel>], iteration_bounds = array<i64: 1>, scalar_prefetch = 0 : i64, scratch_operands = 0 : i64, tpu.core_type = #tpu.core_type<tc>, window_params = [{transform_indices = @transform_0, window_bounds = array<i64: 16, 96>}, {pipeline_mode = #tpu.pipeline_mode<synchronous>, transform_indices = @transform_1, window_bounds = array<i64: 96, 512>}, {pipeline_mode = #tpu.pipeline_mode<synchronous>, transform_indices = @transform_2, window_bounds = array<i64: 1, 512>}, {pipeline_mode = #tpu.pipeline_mode<synchronous>, transform_indices = @transform_3, window_bounds = array<i64: 512, 256>}, {pipeline_mode = #tpu.pipeline_mode<synchronous>, transform_indices = @transform_4, window_bounds = array<i64: 1, 256>}, {pipeline_mode = #tpu.pipeline_mode<synchronous>, transform_indices = @transform_5, window_bounds = array<i64: 256, 1>}, {pipeline_mode = #tpu.pipeline_mode<synchronous>, transform_indices = @transform_6, window_bounds = array<i64: 1, 1>}, {transform_indices = @transform_7, window_bounds = array<i64: 16, 1>}]} {
    %c0 = arith.constant 0 : index
    %c0_0 = arith.constant 0 : index
    %0 = vector.load %arg1[%c0, %c0_0] : memref<16x96xf32, #tpu.memory_space<vmem>>, vector<16x96xf32>
    %1 = arith.truncf %0 : vector<16x96xf32> to vector<16x96xbf16>
    %c0_1 = arith.constant 0 : index
    %c0_2 = arith.constant 0 : index
    %2 = vector.load %arg2[%c0_1, %c0_2] : memref<96x512xbf16, #tpu.memory_space<vmem>>, vector<96x512xbf16>
    %cst = arith.constant dense<0.000000e+00> : vector<16x512xf32>
    %3 = tpu.matmul %1, %2, %cst {dimension_numbers = #tpu.dot_dimension_numbers<[1], [0], [0], [1], [0, 0, 1, 1], [], []>} : vector<16x96xbf16>, vector<96x512xbf16>, vector<16x512xf32> -> vector<16x512xf32>
    %4 = arith.truncf %3 : vector<16x512xf32> to vector<16x512xbf16>
    %c0_3 = arith.constant 0 : index
    %c0_4 = arith.constant 0 : index
    %5 = vector.load %arg3[%c0_3, %c0_4] : memref<1x512xbf16, #tpu.memory_space<vmem>>, vector<1x512xbf16>
    %6 = vector.broadcast %5 : vector<1x512xbf16> to vector<16x512xbf16>
    %7 = arith.addf %4, %6 : vector<16x512xbf16>
    %cst_5 = arith.constant 2.001950e-01 : bf16
    %8 = vector.broadcast %cst_5 : bf16 to vector<16x512xbf16>
    %9 = arith.mulf %8, %7 : vector<16x512xbf16>
    %10 = arith.maximumf %7, %9 : vector<16x512xbf16>
    %c0_6 = arith.constant 0 : index
    %c0_7 = arith.constant 0 : index
    %11 = vector.load %arg4[%c0_6, %c0_7] : memref<512x256xbf16, #tpu.memory_space<vmem>>, vector<512x256xbf16>
    %cst_8 = arith.constant dense<0.000000e+00> : vector<16x256xf32>
    %12 = tpu.matmul %10, %11, %cst_8 {dimension_numbers = #tpu.dot_dimension_numbers<[1], [0], [0], [1], [0, 0, 1, 1], [], []>} : vector<16x512xbf16>, vector<512x256xbf16>, vector<16x256xf32> -> vector<16x256xf32>
    %13 = arith.truncf %12 : vector<16x256xf32> to vector<16x256xbf16>
    %c0_9 = arith.constant 0 : index
    %c0_10 = arith.constant 0 : index
    %14 = vector.load %arg5[%c0_9, %c0_10] : memref<1x256xbf16, #tpu.memory_space<vmem>>, vector<1x256xbf16>
    %15 = vector.broadcast %14 : vector<1x256xbf16> to vector<16x256xbf16>
    %16 = arith.addf %13, %15 : vector<16x256xbf16>
    %cst_11 = arith.constant 2.001950e-01 : bf16
    %17 = vector.broadcast %cst_11 : bf16 to vector<16x256xbf16>
    %18 = arith.mulf %17, %16 : vector<16x256xbf16>
    %19 = arith.maximumf %16, %18 : vector<16x256xbf16>
    %c0_12 = arith.constant 0 : index
    %c0_13 = arith.constant 0 : index
    %20 = vector.load %arg6[%c0_12, %c0_13] : memref<256x1xbf16, #tpu.memory_space<vmem>>, vector<256x1xbf16>
    %cst_14 = arith.constant dense<0.000000e+00> : vector<16x1xf32>
    %21 = tpu.matmul %19, %20, %cst_14 {dimension_numbers = #tpu.dot_dimension_numbers<[1], [0], [0], [1], [0, 0, 1, 1], [], []>} : vector<16x256xbf16>, vector<256x1xbf16>, vector<16x1xf32> -> vector<16x1xf32>
    %c0_15 = arith.constant 0 : index
    %c0_16 = arith.constant 0 : index
    %22 = vector.load %arg7[%c0_15, %c0_16] : memref<1x1xf32, #tpu.memory_space<vmem>>, vector<1x1xf32>
    %23 = vector.broadcast %22 : vector<1x1xf32> to vector<16x1xf32>
    %24 = arith.addf %21, %23 : vector<16x1xf32>
    %25 = arith.negf %24 : vector<16x1xf32>
    %26 = math.exp %25 : vector<16x1xf32>
    %cst_17 = arith.constant 1.000000e+00 : f32
    %27 = vector.broadcast %cst_17 : f32 to vector<16x1xf32>
    %28 = arith.addf %27, %26 : vector<16x1xf32>
    %29 = arith.divf %27, %28 : vector<16x1xf32>
    %c0_18 = arith.constant 0 : index
    %c0_19 = arith.constant 0 : index
    %30 = vector.load %arg8[%c0_18, %c0_19] : memref<16x1xf32, #tpu.memory_space<vmem>>, vector<16x1xf32>
    tpu.vector_store %arg8[%c0_18, %c0_19], %29 {strides = array<i32>} : memref<16x1xf32, #tpu.memory_space<vmem>>, vector<16x1xf32>,
    return
  }
  func.func @transform_0(%arg0: i32) -> (i32, i32) {
    %c0_i32 = arith.constant 0 : i32
    %c0_i32_0 = arith.constant 0 : i32
    return %arg0, %c0_i32 : i32, i32
  }
  func.func @transform_1(%arg0: i32) -> (i32, i32) {
    %c0_i32 = arith.constant 0 : i32
    %c0_i32_0 = arith.constant 0 : i32
    %c0_i32_1 = arith.constant 0 : i32
    return %c0_i32, %c0_i32_0 : i32, i32
  }
  func.func @transform_2(%arg0: i32) -> (i32, i32) {
    %c0_i32 = arith.constant 0 : i32
    %c0_i32_0 = arith.constant 0 : i32
    %c0_i32_1 = arith.constant 0 : i32
    return %c0_i32, %c0_i32_0 : i32, i32
  }
  func.func @transform_3(%arg0: i32) -> (i32, i32) {
    %c0_i32 = arith.constant 0 : i32
    %c0_i32_0 = arith.constant 0 : i32
    %c0_i32_1 = arith.constant 0 : i32
    return %c0_i32, %c0_i32_0 : i32, i32
  }
  func.func @transform_4(%arg0: i32) -> (i32, i32) {
    %c0_i32 = arith.constant 0 : i32
    %c0_i32_0 = arith.constant 0 : i32
    %c0_i32_1 = arith.constant 0 : i32
    return %c0_i32, %c0_i32_0 : i32, i32
  }
  func.func @transform_5(%arg0: i32) -> (i32, i32) {
    %c0_i32 = arith.constant 0 : i32
    %c0_i32_0 = arith.constant 0 : i32
    %c0_i32_1 = arith.constant 0 : i32
    return %c0_i32, %c0_i32_0 : i32, i32
  }
  func.func @transform_6(%arg0: i32) -> (i32, i32) {
    %c0_i32 = arith.constant 0 : i32
    %c0_i32_0 = arith.constant 0 : i32
    %c0_i32_1 = arith.constant 0 : i32
    return %c0_i32, %c0_i32_0 : i32, i32
  }
  func.func @transform_7(%arg0: i32) -> (i32, i32) {
    %c0_i32 = arith.constant 0 : i32
    %c0_i32_0 = arith.constant 0 : i32
    return %arg0, %c0_i32 : i32, i32
  }
}

</mosaic_0001>

<llo_original>
// kernel: discriminator_forward.1
$region0: #{discriminator_forward.1}
  #allocation0 [shape = 'u32[]', space=smem, size = 0x4, offset = 0x4, fixed_abs, tag = 'smem constant byte address 0x4 - core index']
  #allocation1 [shape = 'u32[144,128]{1,0:T(1,128)}', space=vmem, size = 0x12000, scoped, tag = 'internal scratch']
  #allocation2 [shape = 'f32[1,1]{1,0:T(1,128)S(1)}', space=vmem, size = 0x200, scoped, tag = 'scoped memory for discriminator_forward.1']
  %s0 = inlined_call_operand.vmem [shape: f32[16,96], index: 0, kind: input, shape index: {}]
  %s1 = inlined_call_operand.vmem [shape: bf16[96,512], index: 1, kind: input, shape index: {}]
  %s2 = inlined_call_operand.vmem [shape: bf16[1,512], index: 2, kind: input, shape index: {}]
  %s3 = inlined_call_operand.hbm [shape: bf16[512,256], index: 3, kind: input, shape index: {}]
  %s4 = inlined_call_operand.vmem [shape: bf16[1,256], index: 4, kind: input, shape index: {}]
  %s5 = inlined_call_operand.vmem [shape: bf16[256,1], index: 5, kind: input, shape index: {}]
  %s6 = inlined_call_operand.<no memory space> [shape: f32[1,1], index: 6, kind: input, shape index: {}]
  %s7 = inlined_call_operand.vmem [shape: f32[16,1], index: 7, kind: output, shape index: {}]
  %s8 = sld [smem:[#allocation0]]
  $region42: #{discriminator_forward.1} parent=0
    _
  %s10 = ssub.s32 1, %s8
  %s11 = scalar_select 0, %s10, %s8
  %v12 = vstv %s6
  %13 = vst [vmem:[#allocation2] sm:$0x1] %v12
  $region1: #{discriminator_forward.1} parent=0
    #allocation3 [shape = 'u8[262144]{0}', space=vmem, size = 0x40000, scoped, tag = 'input window, operand 3, single buffered']
    #allocation4 [shape = 's32[1]{0}', space=sflag, size = 0x4, scoped, tag = 'scoped memory for discriminator_forward.1']
    %14 = vsyncpa [#allocation4], 0
    // Predicated region
    $region2: #{discriminator_forward.1} parent=1 // pred_check
      _
    $region3: #{discriminator_forward.1} parent=1 // pred_check_branch
      %16 = sbr.rel (0) target = $region5
    $region4: #{discriminator_forward.1} parent=1 // pred_region
      _
    $region5: #{discriminator_forward.1} parent=1 // pred_fallthru
      _
    // Predicated region
    $region6: #{discriminator_forward.1} parent=1 // pred_check
      _
    $region7: #{discriminator_forward.1} parent=1 // pred_check_branch
      %18 = sbr.rel (0) target = $region9
    $region8: #{discriminator_forward.1} parent=1 // pred_region
      _
    $region9: #{discriminator_forward.1} parent=1 // pred_fallthru
      _
    // Predicated region
    $region10: #{discriminator_forward.1} parent=1 // pred_check
      _
    $region11: #{discriminator_forward.1} parent=1 // pred_check_branch
      %20 = sbr.rel (0) target = $region13
    $region12: #{discriminator_forward.1} parent=1 // pred_region
      _
    $region13: #{discriminator_forward.1} parent=1 // pred_fallthru
      _
    // Predicated region
    $region14: #{discriminator_forward.1} parent=1 // pred_check
      _
    $region15: #{discriminator_forward.1} parent=1 // pred_check_branch
      %22 = sbr.rel (0) target = $region17
    $region16: #{discriminator_forward.1} parent=1 // pred_region
      %s24 = ssub.s32 8192, 8192
      %25 = vsyncadd [#allocation4], %s24
      %s26 = sshll.u32 [#allocation3], 4
      %s27 = int_to_ptr.vmem [resolvable:$true] %s26
      %32 = dma.hbm_to_vmem [thread:$0]  %s3, 8192, %s27, [#allocation4], 128, 128, 8
    $region17: #{discriminator_forward.1} parent=1 // pred_fallthru
      _
    // Predicated region
    $region18: #{discriminator_forward.1} parent=1 // pred_check
      _
    $region19: #{discriminator_forward.1} parent=1 // pred_check_branch
      %34 = sbr.rel (0) target = $region21
    $region20: #{discriminator_forward.1} parent=1 // pred_region
      _
    $region21: #{discriminator_forward.1} parent=1 // pred_fallthru
      _
    // Predicated region
    $region22: #{discriminator_forward.1} parent=1 // pred_check
      _
    $region23: #{discriminator_forward.1} parent=1 // pred_check_branch
      %36 = sbr.rel (0) target = $region25
    $region24: #{discriminator_forward.1} parent=1 // pred_region
      _
    $region25: #{discriminator_forward.1} parent=1 // pred_fallthru
      _
    // Predicated region
    $region26: #{discriminator_forward.1} parent=1 // pred_check
      _
    $region27: #{discriminator_forward.1} parent=1 // pred_check_branch
      %38 = sbr.rel (0) target = $region29
    $region28: #{discriminator_forward.1} parent=1 // pred_region
      _
    $region29: #{discriminator_forward.1} parent=1 // pred_fallthru
      _
    // Predicated region
    $region30: #{discriminator_forward.1} parent=1 // pred_check
      _
    $region31: #{discriminator_forward.1} parent=1 // pred_check_branch
      %40 = sbr.rel (0) target = $region33
    $region32: #{discriminator_forward.1} parent=1 // pred_region
      %41 = dma.done [#allocation4], 8192
    $region33: #{discriminator_forward.1} parent=1 // pred_fallthru
      _
    %v44 = vld [vmem:[%s0] sm:$0xff]
    %v45 = vld [vmem:[%s0 + $0x8] sm:$0xff]
    %v46 = vpack.c.bf16 %v45, %v44
    %v47 = vld [vmem:[%s1] sm:$0xff]
    %v48 = vld [vmem:[%s1 + $0x8] sm:$0xff]
    %v49 = vld [vmem:[%s1 + $0x10] sm:$0xff]
    %v50 = vld [vmem:[%s1 + $0x18] sm:$0xff]
    %v51 = vld [vmem:[%s1 + $0x20] sm:$0xff]
    %v52 = vld [vmem:[%s1 + $0x28] sm:$0xff]
    %v53 = vld [vmem:[%s1 + $0x30] sm:$0xff]
    %v54 = vld [vmem:[%s1 + $0x38] sm:$0xff]
    %v55 = vld [vmem:[%s1 + $0x40] sm:$0xff]
    %v56 = vld [vmem:[%s1 + $0x48] sm:$0xff]
    %v57 = vld [vmem:[%s1 + $0x50] sm:$0xff]
    %v58 = vld [vmem:[%s1 + $0x58] sm:$0xff]
    %v59 = vld [vmem:[%s1 + $0x60] sm:$0xff]
    %v60 = vld [vmem:[%s1 + $0x68] sm:$0xff]
    %v61 = vld [vmem:[%s1 + $0x70] sm:$0xff]
    %v62 = vld [vmem:[%s1 + $0x78] sm:$0xff]
    %v63 = vld [vmem:[%s1 + $0x80] sm:$0xff]
    %v64 = vld [vmem:[%s1 + $0x88] sm:$0xff]
    %v65 = vld [vmem:[%s1 + $0x90] sm:$0xff]
    %v66 = vld [vmem:[%s1 + $0x98] sm:$0xff]
    %v67 = vld [vmem:[%s1 + $0xa0] sm:$0xff]
    %v68 = vld [vmem:[%s1 + $0xa8] sm:$0xff]
    %v69 = vld [vmem:[%s1 + $0xb0] sm:$0xff]
    %v70 = vld [vmem:[%s1 + $0xb8] sm:$0xff]
    %v95 = vunpack.c.l.b16 %v47
    %v96 = vunpack.c.h.b16 %v47
    %v97 = vunpack.c.l.b16 %v48
    %v98 = vunpack.c.h.b16 %v48
    %v99 = vunpack.c.l.b16 %v49
    %v100 = vunpack.c.h.b16 %v49
    %v101 = vunpack.c.l.b16 %v50
    %v102 = vunpack.c.h.b16 %v50
    %v103 = vunpack.c.l.b16 %v51
    %v104 = vunpack.c.h.b16 %v51
    %v105 = vunpack.c.l.b16 %v52
    %v106 = vunpack.c.h.b16 %v52
    %v107 = vunpack.c.l.b16 %v53
    %v108 = vunpack.c.h.b16 %v53
    %v109 = vunpack.c.l.b16 %v54
    %v110 = vunpack.c.h.b16 %v54
    %v111 = vunpack.c.l.b16 %v55
    %v112 = vunpack.c.h.b16 %v55
    %v113 = vunpack.c.l.b16 %v56
    %v114 = vunpack.c.h.b16 %v56
    %v115 = vunpack.c.l.b16 %v57
    %v116 = vunpack.c.h.b16 %v57
    %v117 = vunpack.c.l.b16 %v58
    %v118 = vunpack.c.h.b16 %v58
    %v119 = vunpack.c.l.b16 %v59
    %v120 = vunpack.c.h.b16 %v59
    %v121 = vunpack.c.l.b16 %v60
    %v122 = vunpack.c.h.b16 %v60
    %v123 = vunpack.c.l.b16 %v61
    %v124 = vunpack.c.h.b16 %v61
    %v125 = vunpack.c.l.b16 %v62
    %v126 = vunpack.c.h.b16 %v62
    %v127 = vunpack.c.l.b16 %v63
    %v128 = vunpack.c.h.b16 %v63
    %v129 = vunpack.c.l.b16 %v64
    %v130 = vunpack.c.h.b16 %v64
    %v131 = vunpack.c.l.b16 %v65
    %v132 = vunpack.c.h.b16 %v65
    %v133 = vunpack.c.l.b16 %v66
    %v134 = vunpack.c.h.b16 %v66
    %v135 = vunpack.c.l.b16 %v67
    %v136 = vunpack.c.h.b16 %v67
    %v137 = vunpack.c.l.b16 %v68
    %v138 = vunpack.c.h.b16 %v68
    %v139 = vunpack.c.l.b16 %v69
    %v140 = vunpack.c.h.b16 %v69
    %v141 = vunpack.c.l.b16 %v70
    %v142 = vunpack.c.h.b16 %v70
    %v143 = vpack.c.b16 %v99, %v95
    %v144 = vpack.c.b16 %v100, %v96
    %v145 = vpack.c.b16 %v101, %v97
    %v146 = vpack.c.b16 %v102, %v98
    %v147 = vpack.c.b16 %v107, %v103
    %v148 = vpack.c.b16 %v108, %v104
    %v149 = vpack.c.b16 %v109, %v105
    %v150 = vpack.c.b16 %v110, %v106
    %v151 = vpack.c.b16 %v115, %v111
    %v152 = vpack.c.b16 %v116, %v112
    %v153 = vpack.c.b16 %v117, %v113
    %v154 = vpack.c.b16 %v118, %v114
    %v155 = vpack.c.b16 %v123, %v119
    %v156 = vpack.c.b16 %v124, %v120
    %v157 = vpack.c.b16 %v125, %v121
    %v158 = vpack.c.b16 %v126, %v122
    %v159 = vpack.c.b16 %v131, %v127
    %v160 = vpack.c.b16 %v132, %v128
    %v161 = vpack.c.b16 %v133, %v129
    %v162 = vpack.c.b16 %v134, %v130
    %v163 = vpack.c.b16 %v139, %v135
    %v164 = vpack.c.b16 %v140, %v136
    %v165 = vpack.c.b16 %v141, %v137
    %v166 = vpack.c.b16 %v142, %v138
    %vm191 = vcmask 785408
    %v193 = vsel %vm191, %v46, 0
    %195 = vmatprep.subr.bf16.mxu0 %v144
    %196 = vmatpush1.bf16.msra.mxu0 %v143
    %197 = vmatprep.subr.bf16.mxu0 %v148
    %198 = vmatpush1.bf16.msra.mxu0 %v147
    %199 = vmatprep.subr.bf16.mxu0 %v152
    %200 = vmatpush1.bf16.msra.mxu0 %v151
    %201 = vmatprep.subr.bf16.mxu0 %v156
    %202 = vmatpush1.bf16.msra.mxu0 %v155
    %203 = vmatprep.subr.bf16.mxu0 %v160
    %204 = vmatpush1.bf16.msra.mxu0 %v159
    %205 = vmatprep.subr.bf16.mxu0 %v164
    %206 = vmatpush1.bf16.msra.mxu0 %v163
    %207 = vmatprep.subr.bf16.mxu0 0
    %208 = vmatpush1.bf16.msra.mxu0 0
    %209 = vmatprep.subr.bf16.mxu0 0
    %210 = vmatpush1.bf16.msra.mxu0 0
    %211 = vmatprep.subr.bf16.mxu0 0
    %212 = vmatpush1.bf16.msra.mxu0 0
    %213 = vmatprep.subr.bf16.mxu0 0
    %214 = vmatpush1.bf16.msra.mxu0 0
    %215 = vmatprep.subr.bf16.mxu0 0
    %216 = vmatpush1.bf16.msra.mxu0 0
    %217 = vmatprep.subr.bf16.mxu0 0
    %218 = vmatpush1.bf16.msra.mxu0 0
    %219 = vmatprep.subr.bf16.mxu0 0
    %220 = vmatpush1.bf16.msra.mxu0 0
    %221 = vmatprep.subr.bf16.mxu0 0
    %222 = vmatpush1.bf16.msra.mxu0 0
    %223 = vmatprep.subr.bf16.mxu0 0
    %224 = vmatpush1.bf16.msra.mxu0 0
    %225 = vmatprep.subr.bf16.mxu0 0
    %226 = vmatpush1.bf16.msra.mxu0 0
    %227 = vmatprep.mubr.bf16.mxu0 0
    %228 = vmatmul.mubr.bf16.gmra.mrb[0].mxu0 %v193
    %v229 = vpop.f32.mrb[0].mxu0
    %v230 = vadd.f32 0.0, %v229
    %v231 = vpop.f32.mrb[0].mxu0
    %v232 = vadd.f32 0.0, %v231
    %v233 = vpop.f32.mrb[0].mxu0
    %v234 = vadd.f32 0.0, %v233
    %v235 = vpop.f32.mrb[0].mxu0
    %v236 = vadd.f32 0.0, %v235
    %237 = vdwg.mxu0
    %238 = vmatprep.subr.bf16.mxu0 %v146
    %239 = vmatpush1.bf16.msra.mxu0 %v145
    %240 = vmatprep.subr.bf16.mxu0 %v150
    %241 = vmatpush1.bf16.msra.mxu0 %v149
    %242 = vmatprep.subr.bf16.mxu0 %v154
    %243 = vmatpush1.bf16.msra.mxu0 %v153
    %244 = vmatprep.subr.bf16.mxu0 %v158
    %245 = vmatpush1.bf16.msra.mxu0 %v157
    %246 = vmatprep.subr.bf16.mxu0 %v162
    %247 = vmatpush1.bf16.msra.mxu0 %v161
    %248 = vmatprep.subr.bf16.mxu0 %v166
    %249 = vmatpush1.bf16.msra.mxu0 %v165
    %250 = vmatprep.subr.bf16.mxu0 0
    %251 = vmatpush1.bf16.msra.mxu0 0
    %252 = vmatprep.subr.bf16.mxu0 0
    %253 = vmatpush1.bf16.msra.mxu0 0
    %254 = vmatprep.subr.bf16.mxu0 0
    %255 = vmatpush1.bf16.msra.mxu0 0
    %256 = vmatprep.subr.bf16.mxu0 0
    %257 = vmatpush1.bf16.msra.mxu0 0
    %258 = vmatprep.subr.bf16.mxu0 0
    %259 = vmatpush1.bf16.msra.mxu0 0
    %260 = vmatprep.subr.bf16.mxu0 0
    %261 = vmatpush1.bf16.msra.mxu0 0
    %262 = vmatprep.subr.bf16.mxu0 0
    %263 = vmatpush1.bf16.msra.mxu0 0
    %264 = vmatprep.subr.bf16.mxu0 0
    %265 = vmatpush1.bf16.msra.mxu0 0
    %266 = vmatprep.subr.bf16.mxu0 0
    %267 = vmatpush1.bf16.msra.mxu0 0
    %268 = vmatprep.subr.bf16.mxu0 0
    %269 = vmatpush1.bf16.msra.mxu0 0
    %270 = vmatprep.mubr.bf16.mxu0 0
    %271 = vmatmul.mubr.bf16.gmra.mrb[0].mxu0 %v193
    %v272 = vpop.f32.mrb[0].mxu0
    %v273 = vadd.f32 0.0, %v272
    %v274 = vpop.f32.mrb[0].mxu0
    %v275 = vadd.f32 0.0, %v274
    %v276 = vpop.f32.mrb[0].mxu0
    %v277 = vadd.f32 0.0, %v276
    %v278 = vpop.f32.mrb[0].mxu0
    %v279 = vadd.f32 0.0, %v278
    %280 = vdwg.mxu0
    %v281 = vpack.c.bf16 %v234, %v230
    %v282 = vpack.c.bf16 %v236, %v232
    %v283 = vpack.c.bf16 %v277, %v273
    %v284 = vpack.c.bf16 %v279, %v275
    %v285 = vld [vmem:[%s2] sm:$0xf]
    %v288 = vunpack.c.l.s4 1966171168
    %v289 = vunpack.c.0.s8 %v288
    %v290 = vlaneseq
    %v291 = vshrl.u32 %v290, 7
    %v292 = vsub.s32 %v289, %v291
    %v293 = vrot.slane %v285, %v292
    %v294 = vcombine.high %v293, %v293
    %v296 = vunpack.c.l.s4 1966171168
    %v297 = vunpack.c.0.s8 %v296
    %v298 = vlaneseq
    %v299 = vshrl.u32 %v298, 7
    %v300 = vsub.s32 %v297, %v299
    %v301 = vrot.slane %v293, %v300
    %v303 = vunpack.c.l.s4 1966171168
    %v304 = vunpack.c.0.s8 %v303
    %v305 = vlaneseq
    %v306 = vshrl.u32 %v305, 7
    %v307 = vsub.s32 %v304, %v306
    %v308 = vrot.slane %v294, %v307
    %v309 = vcombine.high %v301, %v301
    %v310 = vcombine.high %v308, %v308
    %v312 = vpack.i.b16 %v301, %v301
    %v314 = vlaneseq
    %v315 = vshrl.u32 %v314, 7
    %v316 = vsub.s32 0, %v315
    %v317 = vrot.slane %v312, %v316
    %v319 = vpack.i.b16 %v308, %v308
    %v321 = vlaneseq
    %v322 = vshrl.u32 %v321, 7
    %v323 = vsub.s32 0, %v322
    %v324 = vrot.slane %v319, %v323
    %v326 = vpack.i.b16 %v309, %v309
    %v328 = vlaneseq
    %v329 = vshrl.u32 %v328, 7
    %v330 = vsub.s32 0, %v329
    %v331 = vrot.slane %v326, %v330
    %v333 = vpack.i.b16 %v310, %v310
    %v335 = vlaneseq
    %v336 = vshrl.u32 %v335, 7
    %v337 = vsub.s32 0, %v336
    %v338 = vrot.slane %v333, %v337
    %v339 = vadd.bf16 %v281, %v317
    %v340 = vadd.bf16 %v282, %v324
    %v341 = vadd.bf16 %v283, %v331
    %v342 = vadd.bf16 %v284, %v338
    %v343 = vmul.bf16 %v339, 1045249613
    %v344 = vmul.bf16 %v340, 1045249613
    %v345 = vmul.bf16 %v341, 1045249613
    %v346 = vmul.bf16 %v342, 1045249613
    %v347 = vmax.bf16 %v339, %v343
    %v348 = vmax.bf16 %v340, %v344
    %v349 = vmax.bf16 %v341, %v345
    %v350 = vmax.bf16 %v342, %v346
    %v351 = vld [vmem:[#allocation3] sm:$0xff]
    %v352 = vld [vmem:[#allocation3 + $0x8] sm:$0xff]
    %v353 = vld [vmem:[#allocation3 + $0x10] sm:$0xff]
    %v354 = vld [vmem:[#allocation3 + $0x18] sm:$0xff]
    %v355 = vld [vmem:[#allocation3 + $0x20] sm:$0xff]
    %v356 = vld [vmem:[#allocation3 + $0x28] sm:$0xff]
    %v357 = vld [vmem:[#allocation3 + $0x30] sm:$0xff]
    %v358 = vld [vmem:[#allocation3 + $0x38] sm:$0xff]
    %v359 = vld [vmem:[#allocation3 + $0x40] sm:$0xff]
    %v360 = vld [vmem:[#allocation3 + $0x48] sm:$0xff]
    %v361 = vld [vmem:[#allocation3 + $0x50] sm:$0xff]
    %v362 = vld [vmem:[#allocation3 + $0x58] sm:$0xff]
    %v363 = vld [vmem:[#allocation3 + $0x60] sm:$0xff]
    %v364 = vld [vmem:[#allocation3 + $0x68] sm:$0xff]
    %v365 = vld [vmem:[#allocation3 + $0x70] sm:$0xff]
    %v366 = vld [vmem:[#allocation3 + $0x78] sm:$0xff]
    %v367 = vld [vmem:[#allocation3 + $0x80] sm:$0xff]
    %v368 = vld [vmem:[#allocation3 + $0x88] sm:$0xff]
    %v369 = vld [vmem:[#allocation3 + $0x90] sm:$0xff]
    %v370 = vld [vmem:[#allocation3 + $0x98] sm:$0xff]
    %v371 = vld [vmem:[#allocation3 + $0xa0] sm:$0xff]
    %v372 = vld [vmem:[#allocation3 + $0xa8] sm:$0xff]
    %v373 = vld [vmem:[#allocation3 + $0xb0] sm:$0xff]
    %v374 = vld [vmem:[#allocation3 + $0xb8] sm:$0xff]
    %v375 = vld [vmem:[#allocation3 + $0xc0] sm:$0xff]
    %v376 = vld [vmem:[#allocation3 + $0xc8] sm:$0xff]
    %v377 = vld [vmem:[#allocation3 + $0xd0] sm:$0xff]
    %v378 = vld [vmem:[#allocation3 + $0xd8] sm:$0xff]
    %v379 = vld [vmem:[#allocation3 + $0xe0] sm:$0xff]
    %v380 = vld [vmem:[#allocation3 + $0xe8] sm:$0xff]
    %v381 = vld [vmem:[#allocation3 + $0xf0] sm:$0xff]
    %v382 = vld [vmem:[#allocation3 + $0xf8] sm:$0xff]
    %v383 = vld [vmem:[#allocation3 + $0x100] sm:$0xff]
    %v384 = vld [vmem:[#allocation3 + $0x108] sm:$0xff]
    %v385 = vld [vmem:[#allocation3 + $0x110] sm:$0xff]
    %v386 = vld [vmem:[#allocation3 + $0x118] sm:$0xff]
    %v387 = vld [vmem:[#allocation3 + $0x120] sm:$0xff]
    %v388 = vld [vmem:[#allocation3 + $0x128] sm:$0xff]
    %v389 = vld [vmem:[#allocation3 + $0x130] sm:$0xff]
    %v390 = vld [vmem:[#allocation3 + $0x138] sm:$0xff]
    %v391 = vld [vmem:[#allocation3 + $0x140] sm:$0xff]
    %v392 = vld [vmem:[#allocation3 + $0x148] sm:$0xff]
    %v393 = vld [vmem:[#allocation3 + $0x150] sm:$0xff]
    %v394 = vld [vmem:[#allocation3 + $0x158] sm:$0xff]
    %v395 = vld [vmem:[#allocation3 + $0x160] sm:$0xff]
    %v396 = vld [vmem:[#allocation3 + $0x168] sm:$0xff]
    %v397 = vld [vmem:[#allocation3 + $0x170] sm:$0xff]
    %v398 = vld [vmem:[#allocation3 + $0x178] sm:$0xff]
    %v399 = vld [vmem:[#allocation3 + $0x180] sm:$0xff]
    %v400 = vld [vmem:[#allocation3 + $0x188] sm:$0xff]
    %v401 = vld [vmem:[#allocation3 + $0x190] sm:$0xff]
    %v402 = vld [vmem:[#allocation3 + $0x198] sm:$0xff]
    %v403 = vld [vmem:[#allocation3 + $0x1a0] sm:$0xff]
    %v404 = vld [vmem:[#allocation3 + $0x1a8] sm:$0xff]
    %v405 = vld [vmem:[#allocation3 + $0x1b0] sm:$0xff]
    %v406 = vld [vmem:[#allocation3 + $0x1b8] sm:$0xff]
    %v407 = vld [vmem:[#allocation3 + $0x1c0] sm:$0xff]
    %v408 = vld [vmem:[#allocation3 + $0x1c8] sm:$0xff]
    %v409 = vld [vmem:[#allocation3 + $0x1d0] sm:$0xff]
    %v410 = vld [vmem:[#allocation3 + $0x1d8] sm:$0xff]
    %v411 = vld [vmem:[#allocation3 + $0x1e0] sm:$0xff]
    %v412 = vld [vmem:[#allocation3 + $0x1e8] sm:$0xff]
    %v413 = vld [vmem:[#allocation3 + $0x1f0] sm:$0xff]
    %v414 = vld [vmem:[#allocation3 + $0x1f8] sm:$0xff]
    %v479 = vunpack.c.l.b16 %v351
    %v480 = vunpack.c.h.b16 %v351
    %v481 = vunpack.c.l.b16 %v352
    %v482 = vunpack.c.h.b16 %v352
    %v483 = vunpack.c.l.b16 %v353
    %v484 = vunpack.c.h.b16 %v353
    %v485 = vunpack.c.l.b16 %v354
    %v486 = vunpack.c.h.b16 %v354
    %v487 = vunpack.c.l.b16 %v355
    %v488 = vunpack.c.h.b16 %v355
    %v489 = vunpack.c.l.b16 %v356
    %v490 = vunpack.c.h.b16 %v356
    %v491 = vunpack.c.l.b16 %v357
    %v492 = vunpack.c.h.b16 %v357
    %v493 = vunpack.c.l.b16 %v358
    %v494 = vunpack.c.h.b16 %v358
    %v495 = vunpack.c.l.b16 %v359
    %v496 = vunpack.c.h.b16 %v359
    %v497 = vunpack.c.l.b16 %v360
    %v498 = vunpack.c.h.b16 %v360
    %v499 = vunpack.c.l.b16 %v361
    %v500 = vunpack.c.h.b16 %v361
    %v501 = vunpack.c.l.b16 %v362
    %v502 = vunpack.c.h.b16 %v362
    %v503 = vunpack.c.l.b16 %v363
    %v504 = vunpack.c.h.b16 %v363
    %v505 = vunpack.c.l.b16 %v364
    %v506 = vunpack.c.h.b16 %v364
    %v507 = vunpack.c.l.b16 %v365
    %v508 = vunpack.c.h.b16 %v365
    %v509 = vunpack.c.l.b16 %v366
    %v510 = vunpack.c.h.b16 %v366
    %v511 = vunpack.c.l.b16 %v367
    %v512 = vunpack.c.h.b16 %v367
    %v513 = vunpack.c.l.b16 %v368
    %v514 = vunpack.c.h.b16 %v368
    %v515 = vunpack.c.l.b16 %v369
    %v516 = vunpack.c.h.b16 %v369
    %v517 = vunpack.c.l.b16 %v370
    %v518 = vunpack.c.h.b16 %v370
    %v519 = vunpack.c.l.b16 %v371
    %v520 = vunpack.c.h.b16 %v371
    %v521 = vunpack.c.l.b16 %v372
    %v522 = vunpack.c.h.b16 %v372
    %v523 = vunpack.c.l.b16 %v373
    %v524 = vunpack.c.h.b16 %v373
    %v525 = vunpack.c.l.b16 %v374
    %v526 = vunpack.c.h.b16 %v374
    %v527 = vunpack.c.l.b16 %v375
    %v528 = vunpack.c.h.b16 %v375
    %v529 = vunpack.c.l.b16 %v376
    %v530 = vunpack.c.h.b16 %v376
    %v531 = vunpack.c.l.b16 %v377
    %v532 = vunpack.c.h.b16 %v377
    %v533 = vunpack.c.l.b16 %v378
    %v534 = vunpack.c.h.b16 %v378
    %v535 = vunpack.c.l.b16 %v379
    %v536 = vunpack.c.h.b16 %v379
    %v537 = vunpack.c.l.b16 %v380
    %v538 = vunpack.c.h.b16 %v380
    %v539 = vunpack.c.l.b16 %v381
    %v540 = vunpack.c.h.b16 %v381
    %v541 = vunpack.c.l.b16 %v382
    %v542 = vunpack.c.h.b16 %v382
    %v543 = vunpack.c.l.b16 %v383
    %v544 = vunpack.c.h.b16 %v383
    %v545 = vunpack.c.l.b16 %v384
    %v546 = vunpack.c.h.b16 %v384
    %v547 = vunpack.c.l.b16 %v385
    %v548 = vunpack.c.h.b16 %v385
    %v549 = vunpack.c.l.b16 %v386
    %v550 = vunpack.c.h.b16 %v386
    %v551 = vunpack.c.l.b16 %v387
    %v552 = vunpack.c.h.b16 %v387
    %v553 = vunpack.c.l.b16 %v388
    %v554 = vunpack.c.h.b16 %v388
    %v555 = vunpack.c.l.b16 %v389
    %v556 = vunpack.c.h.b16 %v389
    %v557 = vunpack.c.l.b16 %v390
    %v558 = vunpack.c.h.b16 %v390
    %v559 = vunpack.c.l.b16 %v391
    %v560 = vunpack.c.h.b16 %v391
    %v561 = vunpack.c.l.b16 %v392
    %v562 = vunpack.c.h.b16 %v392
    %v563 = vunpack.c.l.b16 %v393
    %v564 = vunpack.c.h.b16 %v393
    %v565 = vunpack.c.l.b16 %v394
    %v566 = vunpack.c.h.b16 %v394
    %v567 = vunpack.c.l.b16 %v395
    %v568 = vunpack.c.h.b16 %v395
    %v569 = vunpack.c.l.b16 %v396
    %v570 = vunpack.c.h.b16 %v396
    %v571 = vunpack.c.l.b16 %v397
    %v572 = vunpack.c.h.b16 %v397
    %v573 = vunpack.c.l.b16 %v398
    %v574 = vunpack.c.h.b16 %v398
    %v575 = vunpack.c.l.b16 %v399
    %v576 = vunpack.c.h.b16 %v399
    %v577 = vunpack.c.l.b16 %v400
    %v578 = vunpack.c.h.b16 %v400
    %v579 = vunpack.c.l.b16 %v401
    %v580 = vunpack.c.h.b16 %v401
    %v581 = vunpack.c.l.b16 %v402
    %v582 = vunpack.c.h.b16 %v402
    %v583 = vunpack.c.l.b16 %v403
    %v584 = vunpack.c.h.b16 %v403
    %v585 = vunpack.c.l.b16 %v404
    %v586 = vunpack.c.h.b16 %v404
    %v587 = vunpack.c.l.b16 %v405
    %v588 = vunpack.c.h.b16 %v405
    %v589 = vunpack.c.l.b16 %v406
    %v590 = vunpack.c.h.b16 %v406
    %v591 = vunpack.c.l.b16 %v407
    %v592 = vunpack.c.h.b16 %v407
    %v593 = vunpack.c.l.b16 %v408
    %v594 = vunpack.c.h.b16 %v408
    %v595 = vunpack.c.l.b16 %v409
    %v596 = vunpack.c.h.b16 %v409
    %v597 = vunpack.c.l.b16 %v410
    %v598 = vunpack.c.h.b16 %v410
    %v599 = vunpack.c.l.b16 %v411
    %v600 = vunpack.c.h.b16 %v411
    %v601 = vunpack.c.l.b16 %v412
    %v602 = vunpack.c.h.b16 %v412
    %v603 = vunpack.c.l.b16 %v413
    %v604 = vunpack.c.h.b16 %v413
    %v605 = vunpack.c.l.b16 %v414
    %v606 = vunpack.c.h.b16 %v414
    %v607 = vpack.c.b16 %v481, %v479
    %v608 = vpack.c.b16 %v482, %v480
    %v609 = vpack.c.b16 %v485, %v483
    %v610 = vpack.c.b16 %v486, %v484
    %v611 = vpack.c.b16 %v489, %v487
    %v612 = vpack.c.b16 %v490, %v488
    %v613 = vpack.c.b16 %v493, %v491
    %v614 = vpack.c.b16 %v494, %v492
    %v615 = vpack.c.b16 %v497, %v495
    %v616 = vpack.c.b16 %v498, %v496
    %v617 = vpack.c.b16 %v501, %v499
    %v618 = vpack.c.b16 %v502, %v500
    %v619 = vpack.c.b16 %v505, %v503
    %v620 = vpack.c.b16 %v506, %v504
    %v621 = vpack.c.b16 %v509, %v507
    %v622 = vpack.c.b16 %v510, %v508
    %v623 = vpack.c.b16 %v513, %v511
    %v624 = vpack.c.b16 %v514, %v512
    %v625 = vpack.c.b16 %v517, %v515
    %v626 = vpack.c.b16 %v518, %v516
    %v627 = vpack.c.b16 %v521, %v519
    %v628 = vpack.c.b16 %v522, %v520
    %v629 = vpack.c.b16 %v525, %v523
    %v630 = vpack.c.b16 %v526, %v524
    %v631 = vpack.c.b16 %v529, %v527
    %v632 = vpack.c.b16 %v530, %v528
    %v633 = vpack.c.b16 %v533, %v531
    %v634 = vpack.c.b16 %v534, %v532
    %v635 = vpack.c.b16 %v537, %v535
    %v636 = vpack.c.b16 %v538, %v536
    %v637 = vpack.c.b16 %v541, %v539
    %v638 = vpack.c.b16 %v542, %v540
    %v639 = vpack.c.b16 %v545, %v543
    %v640 = vpack.c.b16 %v546, %v544
    %v641 = vpack.c.b16 %v549, %v547
    %v642 = vpack.c.b16 %v550, %v548
    %v643 = vpack.c.b16 %v553, %v551
    %v644 = vpack.c.b16 %v554, %v552
    %v645 = vpack.c.b16 %v557, %v555
    %v646 = vpack.c.b16 %v558, %v556
    %v647 = vpack.c.b16 %v561, %v559
    %v648 = vpack.c.b16 %v562, %v560
    %v649 = vpack.c.b16 %v565, %v563
    %v650 = vpack.c.b16 %v566, %v564
    %v651 = vpack.c.b16 %v569, %v567
    %v652 = vpack.c.b16 %v570, %v568
    %v653 = vpack.c.b16 %v573, %v571
    %v654 = vpack.c.b16 %v574, %v572
    %v655 = vpack.c.b16 %v577, %v575
    %v656 = vpack.c.b16 %v578, %v576
    %v657 = vpack.c.b16 %v581, %v579
    %v658 = vpack.c.b16 %v582, %v580
    %v659 = vpack.c.b16 %v585, %v583
    %v660 = vpack.c.b16 %v586, %v584
    %v661 = vpack.c.b16 %v589, %v587
    %v662 = vpack.c.b16 %v590, %v588
    %v663 = vpack.c.b16 %v593, %v591
    %v664 = vpack.c.b16 %v594, %v592
    %v665 = vpack.c.b16 %v597, %v595
    %v666 = vpack.c.b16 %v598, %v596
    %v667 = vpack.c.b16 %v601, %v599
    %v668 = vpack.c.b16 %v602, %v600
    %v669 = vpack.c.b16 %v605, %v603
    %v670 = vpack.c.b16 %v606, %v604
    %735 = vmatprep.subr.bf16.mxu0 %v608
    %736 = vmatpush1.bf16.msra.mxu0 %v607
    %737 = vmatprep.subr.bf16.mxu0 %v610
    %738 = vmatpush1.bf16.msra.mxu0 %v609
    %739 = vmatprep.subr.bf16.mxu0 %v612
    %740 = vmatpush1.bf16.msra.mxu0 %v611
    %741 = vmatprep.subr.bf16.mxu0 %v614
    %742 = vmatpush1.bf16.msra.mxu0 %v613
    %743 = vmatprep.subr.bf16.mxu0 %v616
    %744 = vmatpush1.bf16.msra.mxu0 %v615
    %745 = vmatprep.subr.bf16.mxu0 %v618
    %746 = vmatpush1.bf16.msra.mxu0 %v617
    %747 = vmatprep.subr.bf16.mxu0 %v620
    %748 = vmatpush1.bf16.msra.mxu0 %v619
    %749 = vmatprep.subr.bf16.mxu0 %v622
    %750 = vmatpush1.bf16.msra.mxu0 %v621
    %751 = vmatprep.subr.bf16.mxu0 %v624
    %752 = vmatpush1.bf16.msra.mxu0 %v623
    %753 = vmatprep.subr.bf16.mxu0 %v626
    %754 = vmatpush1.bf16.msra.mxu0 %v625
    %755 = vmatprep.subr.bf16.mxu0 %v628
    %756 = vmatpush1.bf16.msra.mxu0 %v627
    %757 = vmatprep.subr.bf16.mxu0 %v630
    %758 = vmatpush1.bf16.msra.mxu0 %v629
    %759 = vmatprep.subr.bf16.mxu0 %v632
    %760 = vmatpush1.bf16.msra.mxu0 %v631
    %761 = vmatprep.subr.bf16.mxu0 %v634
    %762 = vmatpush1.bf16.msra.mxu0 %v633
    %763 = vmatprep.subr.bf16.mxu0 %v636
    %764 = vmatpush1.bf16.msra.mxu0 %v635
    %765 = vmatprep.subr.bf16.mxu0 %v638
    %766 = vmatpush1.bf16.msra.mxu0 %v637
    %767 = vmatprep.mubr.bf16.mxu0 %v348
    %768 = vmatmul.mubr.bf16.gmra.mrb[0].mxu0 %v347
    %v769 = vpop.f32.mrb[0].mxu0
    %v770 = vadd.f32 0.0, %v769
    %v771 = vpop.f32.mrb[0].mxu0
    %v772 = vadd.f32 0.0, %v771
    %v773 = vpop.f32.mrb[0].mxu0
    %v774 = vadd.f32 0.0, %v773
    %v775 = vpop.f32.mrb[0].mxu0
    %v776 = vadd.f32 0.0, %v775
    %777 = vdwg.mxu0
    %778 = vmatprep.subr.bf16.mxu0 %v640
    %779 = vmatpush1.bf16.msra.mxu0 %v639
    %780 = vmatprep.subr.bf16.mxu0 %v642
    %781 = vmatpush1.bf16.msra.mxu0 %v641
    %782 = vmatprep.subr.bf16.mxu0 %v644
    %783 = vmatpush1.bf16.msra.mxu0 %v643
    %784 = vmatprep.subr.bf16.mxu0 %v646
    %785 = vmatpush1.bf16.msra.mxu0 %v645
    %786 = vmatprep.subr.bf16.mxu0 %v648
    %787 = vmatpush1.bf16.msra.mxu0 %v647
    %788 = vmatprep.subr.bf16.mxu0 %v650
    %789 = vmatpush1.bf16.msra.mxu0 %v649
    %790 = vmatprep.subr.bf16.mxu0 %v652
    %791 = vmatpush1.bf16.msra.mxu0 %v651
    %792 = vmatprep.subr.bf16.mxu0 %v654
    %793 = vmatpush1.bf16.msra.mxu0 %v653
    %794 = vmatprep.subr.bf16.mxu0 %v656
    %795 = vmatpush1.bf16.msra.mxu0 %v655
    %796 = vmatprep.subr.bf16.mxu0 %v658
    %797 = vmatpush1.bf16.msra.mxu0 %v657
    %798 = vmatprep.subr.bf16.mxu0 %v660
    %799 = vmatpush1.bf16.msra.mxu0 %v659
    %800 = vmatprep.subr.bf16.mxu0 %v662
    %801 = vmatpush1.bf16.msra.mxu0 %v661
    %802 = vmatprep.subr.bf16.mxu0 %v664
    %803 = vmatpush1.bf16.msra.mxu0 %v663
    %804 = vmatprep.subr.bf16.mxu0 %v666
    %805 = vmatpush1.bf16.msra.mxu0 %v665
    %806 = vmatprep.subr.bf16.mxu0 %v668
    %807 = vmatpush1.bf16.msra.mxu0 %v667
    %808 = vmatprep.subr.bf16.mxu0 %v670
    %809 = vmatpush1.bf16.msra.mxu0 %v669
    %810 = vmatprep.mubr.bf16.mxu0 %v350
    %811 = vmatmul.mubr.bf16.gmra.mrb[0].mxu0 %v349
    %v812 = vpop.f32.mrb[0].mxu0
    %v813 = vadd.f32 %v770, %v812
    %v814 = vpop.f32.mrb[0].mxu0
    %v815 = vadd.f32 %v772, %v814
    %v816 = vpop.f32.mrb[0].mxu0
    %v817 = vadd.f32 %v774, %v816
    %v818 = vpop.f32.mrb[0].mxu0
    %v819 = vadd.f32 %v776, %v818
    %820 = vdwg.mxu0
    %v821 = vpack.c.bf16 %v817, %v813
    %v822 = vpack.c.bf16 %v819, %v815
    %v823 = vld [vmem:[%s4] sm:$0x3]
    %v826 = vunpack.c.l.s4 1966171168
    %v827 = vunpack.c.0.s8 %v826
    %v828 = vlaneseq
    %v829 = vshrl.u32 %v828, 7
    %v830 = vsub.s32 %v827, %v829
    %v831 = vrot.slane %v823, %v830
    %v832 = vcombine.high %v831, %v831
    %v834 = vunpack.c.l.s4 1966171168
    %v835 = vunpack.c.0.s8 %v834
    %v836 = vlaneseq
    %v837 = vshrl.u32 %v836, 7
    %v838 = vsub.s32 %v835, %v837
    %v839 = vrot.slane %v831, %v838
    %v841 = vunpack.c.l.s4 1966171168
    %v842 = vunpack.c.0.s8 %v841
    %v843 = vlaneseq
    %v844 = vshrl.u32 %v843, 7
    %v845 = vsub.s32 %v842, %v844
    %v846 = vrot.slane %v832, %v845
    %v848 = vpack.i.b16 %v839, %v839
    %v850 = vlaneseq
    %v851 = vshrl.u32 %v850, 7
    %v852 = vsub.s32 0, %v851
    %v853 = vrot.slane %v848, %v852
    %v855 = vpack.i.b16 %v846, %v846
    %v857 = vlaneseq
    %v858 = vshrl.u32 %v857, 7
    %v859 = vsub.s32 0, %v858
    %v860 = vrot.slane %v855, %v859
    %v861 = vadd.bf16 %v821, %v853
    %v862 = vadd.bf16 %v822, %v860
    %v863 = vmul.bf16 %v861, 1045249613
    %v864 = vmul.bf16 %v862, 1045249613
    %v865 = vmax.bf16 %v861, %v863
    %v866 = vmax.bf16 %v862, %v864
    %v867 = vld [vmem:[%s5] sm:$0xf]
    %v868 = vld [vmem:[%s5 + $0x4] sm:$0xf]
    %v869 = vld [vmem:[%s5 + $0x8] sm:$0xf]
    %v870 = vld [vmem:[%s5 + $0xc] sm:$0xf]
    %v871 = vld [vmem:[%s5 + $0x10] sm:$0xf]
    %v872 = vld [vmem:[%s5 + $0x14] sm:$0xf]
    %v873 = vld [vmem:[%s5 + $0x18] sm:$0xf]
    %v874 = vld [vmem:[%s5 + $0x1c] sm:$0xf]
    %v875 = vld [vmem:[%s5 + $0x20] sm:$0xf]
    %v876 = vld [vmem:[%s5 + $0x24] sm:$0xf]
    %v877 = vld [vmem:[%s5 + $0x28] sm:$0xf]
    %v878 = vld [vmem:[%s5 + $0x2c] sm:$0xf]
    %v879 = vld [vmem:[%s5 + $0x30] sm:$0xf]
    %v880 = vld [vmem:[%s5 + $0x34] sm:$0xf]
    %v881 = vld [vmem:[%s5 + $0x38] sm:$0xf]
    %v882 = vld [vmem:[%s5 + $0x3c] sm:$0xf]
    %v883 = vld [vmem:[%s5 + $0x40] sm:$0xf]
    %v884 = vld [vmem:[%s5 + $0x44] sm:$0xf]
    %v885 = vld [vmem:[%s5 + $0x48] sm:$0xf]
    %v886 = vld [vmem:[%s5 + $0x4c] sm:$0xf]
    %v887 = vld [vmem:[%s5 + $0x50] sm:$0xf]
    %v888 = vld [vmem:[%s5 + $0x54] sm:$0xf]
    %v889 = vld [vmem:[%s5 + $0x58] sm:$0xf]
    %v890 = vld [vmem:[%s5 + $0x5c] sm:$0xf]
    %v891 = vld [vmem:[%s5 + $0x60] sm:$0xf]
    %v892 = vld [vmem:[%s5 + $0x64] sm:$0xf]
    %v893 = vld [vmem:[%s5 + $0x68] sm:$0xf]
    %v894 = vld [vmem:[%s5 + $0x6c] sm:$0xf]
    %v895 = vld [vmem:[%s5 + $0x70] sm:$0xf]
    %v896 = vld [vmem:[%s5 + $0x74] sm:$0xf]
    %v897 = vld [vmem:[%s5 + $0x78] sm:$0xf]
    %v898 = vld [vmem:[%s5 + $0x7c] sm:$0xf]
    %v899 = vld [vmem:[#allocation2] sm:$0x1]
    %v901 = vlaneseq
    %v902 = vshrl.u32 %v901, 7
    %v903 = vsub.s32 0, %v902
    %v904 = vrot.slane %v899, %v903
    %v938 = vunpack.c.l.b16 %v867
    %v939 = vunpack.c.l.b16 %v868
    %v940 = vunpack.c.l.b16 %v869
    %v941 = vunpack.c.l.b16 %v870
    %v942 = vunpack.c.l.b16 %v871
    %v943 = vunpack.c.l.b16 %v872
    %v944 = vunpack.c.l.b16 %v873
    %v945 = vunpack.c.l.b16 %v874
    %v946 = vunpack.c.l.b16 %v875
    %v947 = vunpack.c.l.b16 %v876
    %v948 = vunpack.c.l.b16 %v877
    %v949 = vunpack.c.l.b16 %v878
    %v950 = vunpack.c.l.b16 %v879
    %v951 = vunpack.c.l.b16 %v880
    %v952 = vunpack.c.l.b16 %v881
    %v953 = vunpack.c.l.b16 %v882
    %v954 = vunpack.c.l.b16 %v883
    %v955 = vunpack.c.l.b16 %v884
    %v956 = vunpack.c.l.b16 %v885
    %v957 = vunpack.c.l.b16 %v886
    %v958 = vunpack.c.l.b16 %v887
    %v959 = vunpack.c.l.b16 %v888
    %v960 = vunpack.c.l.b16 %v889
    %v961 = vunpack.c.l.b16 %v890
    %v962 = vunpack.c.l.b16 %v891
    %v963 = vunpack.c.l.b16 %v892
    %v964 = vunpack.c.l.b16 %v893
    %v965 = vunpack.c.l.b16 %v894
    %v966 = vunpack.c.l.b16 %v895
    %v967 = vunpack.c.l.b16 %v896
    %v968 = vunpack.c.l.b16 %v897
    %v969 = vunpack.c.l.b16 %v898
    %v970 = vpack.c.b16 %v939, %v938
    %v971 = vpack.c.b16 %v941, %v940
    %v972 = vpack.c.b16 %v943, %v942
    %v973 = vpack.c.b16 %v945, %v944
    %v974 = vpack.c.b16 %v947, %v946
    %v975 = vpack.c.b16 %v949, %v948
    %v976 = vpack.c.b16 %v951, %v950
    %v977 = vpack.c.b16 %v953, %v952
    %v978 = vpack.c.b16 %v955, %v954
    %v979 = vpack.c.b16 %v957, %v956
    %v980 = vpack.c.b16 %v959, %v958
    %v981 = vpack.c.b16 %v961, %v960
    %v982 = vpack.c.b16 %v963, %v962
    %v983 = vpack.c.b16 %v965, %v964
    %v984 = vpack.c.b16 %v967, %v966
    %v985 = vpack.c.b16 %v969, %v968
    %1002 = vmatprep.subr.bf16.mxu0 0
    %1003 = vmatpush1.bf16.msra.mxu0 %v970
    %1004 = vmatprep.subr.bf16.mxu0 0
    %1005 = vmatpush1.bf16.msra.mxu0 %v971
    %1006 = vmatprep.subr.bf16.mxu0 0
    %1007 = vmatpush1.bf16.msra.mxu0 %v972
    %1008 = vmatprep.subr.bf16.mxu0 0
    %1009 = vmatpush1.bf16.msra.mxu0 %v973
    %1010 = vmatprep.subr.bf16.mxu0 0
    %1011 = vmatpush1.bf16.msra.mxu0 %v974
    %1012 = vmatprep.subr.bf16.mxu0 0
    %1013 = vmatpush1.bf16.msra.mxu0 %v975
    %1014 = vmatprep.subr.bf16.mxu0 0
    %1015 = vmatpush1.bf16.msra.mxu0 %v976
    %1016 = vmatprep.subr.bf16.mxu0 0
    %1017 = vmatpush1.bf16.msra.mxu0 %v977
    %1018 = vmatprep.subr.bf16.mxu0 0
    %1019 = vmatpush1.bf16.msra.mxu0 %v978
    %1020 = vmatprep.subr.bf16.mxu0 0
    %1021 = vmatpush1.bf16.msra.mxu0 %v979
    %1022 = vmatprep.subr.bf16.mxu0 0
    %1023 = vmatpush1.bf16.msra.mxu0 %v980
    %1024 = vmatprep.subr.bf16.mxu0 0
    %1025 = vmatpush1.bf16.msra.mxu0 %v981
    %1026 = vmatprep.subr.bf16.mxu0 0
    %1027 = vmatpush1.bf16.msra.mxu0 %v982
    %1028 = vmatprep.subr.bf16.mxu0 0
    %1029 = vmatpush1.bf16.msra.mxu0 %v983
    %1030 = vmatprep.subr.bf16.mxu0 0
    %1031 = vmatpush1.bf16.msra.mxu0 %v984
    %1032 = vmatprep.subr.bf16.mxu0 0
    %1033 = vmatpush1.bf16.msra.mxu0 %v985
    %1034 = vmatprep.mubr.bf16.mxu0 %v866
    %1035 = vmatmul.mubr.bf16.gmra.mrb[0].mxu0 %v865
    %v1036 = vpop.f32.mrb[0].mxu0
    %v1037 = vadd.f32 %v904, %v1036
    %v1038 = vpop.f32.mrb[0].mxu0
    %v1039 = vpop.f32.mrb[0].mxu0
    %v1040 = vadd.f32 %v904, %v1039
    %v1041 = vpop.f32.mrb[0].mxu0
    %1042 = vdwg.mxu0
    %v1043 = vxor.u32 %v1037, 2147483648
    %v1044 = vxor.u32 %v1040, 2147483648
    %v1045 = vmul.f32 %v1043, 1.442695
    %v1046 = vpow.pop %v1045
    %v1047 = vmul.f32 %v1044, 1.442695
    %v1048 = vpow.pop %v1047
    %v1049 = vadd.f32 %v1046, 1.0
    %v1050 = vadd.f32 %v1048, 1.0
    %v1051 = vrcp.pop %v1049
    %v1052 = vmul.f32 1.0, %v1051
    %v1053 = vrcp.pop %v1050
    %v1054 = vmul.f32 1.0, %v1053
    %vm1055 = vcmask 7168
    %1056 = vst.msk [vmem:[%s7] sm:$0xff] %vm1055, %v1052
    %1057 = vst.msk [vmem:[%s7 + $0x8] sm:$0xff] %vm1055, %v1054
    // Predicated region
    $region34: #{discriminator_forward.1} parent=1 // pred_check
      _
    $region35: #{discriminator_forward.1} parent=1 // pred_check_branch
      %1059 = sbr.rel (0) target = $region37
    $region36: #{discriminator_forward.1} parent=1 // pred_region
      _
    $region37: #{discriminator_forward.1} parent=1 // pred_fallthru
      _
    // Predicated region
    $region38: #{discriminator_forward.1} parent=1 // pred_check
      _
    $region39: #{discriminator_forward.1} parent=1 // pred_check_branch
      %1061 = sbr.rel (0) target = $region41
    $region40: #{discriminator_forward.1} parent=1 // pred_region
      _
    $region41: #{discriminator_forward.1} parent=1 // pred_fallthru
      _
    %1062 = vsyncpa [#allocation4], 1

</llo_original>
